<compile_context>
chip_gen: v5e
topology: v5e:2x2
jax: 0.10.0
libtpu: 0.0.40
codegen_flags: <defaults>
</compile_context>

<pallas_src>
import functools
import re

import numpy as np

import jax
import jax.numpy as jnp
from jax import lax
from jax.experimental import pallas as pl
from jax.experimental.pallas import tpu as pltpu


# ---------------------------------------------------------------------------
# Kernel
# ---------------------------------------------------------------------------
def _make_wavelet_kernel(wavelet_orders, level, data_path_bf16):
    """Per-batch-block kernel mirroring construct_wavelet() + windowed()."""
    num_w = len(wavelet_orders)
    data_dtype = jnp.bfloat16 if data_path_bf16 else jnp.float32

    def mm(a, b):
        # batched matmul on the MXU, f32 accumulation
        return jnp.einsum("bij,bjk->bik", a, b,
                          preferred_element_type=jnp.float32)

    # TODO(synk): for N well below the MXU tile (N <= ~64), pack several batch
    # elements into one block-diagonal (k*N, k*N) operator per MXU pass to
    # avoid tile-padding waste; not implemented here.

    def kernel(adjT_ref, inv_deg_ref, x_ref, out_ref):
        adjT = adjT_ref[...]          # (Bb, N, N): A^T after no_zero_adj
        inv_deg = inv_deg_ref[...]    # (Bb, N, 1): zero-guarded 1/degree
        x = x_ref[...]                # (Bb, C, N): x in its native layout
        n = adjT.shape[-1]

        row = lax.broadcasted_iota(jnp.int32, (n, n), 0)
        col = lax.broadcasted_iota(jnp.int32, (n, n), 1)
        eye = (row == col).astype(jnp.float32)          # (N, N), shared

        # Transposed diffusion operator (pure row scale; VPU only).
        s = eye[None] - 0.5 * inv_deg * adjT            # (Bb, N, N), f32

        # Wavelet bank (transposed).  Every wavelet / the low pass is a
        # polynomial in T, so running the reference power chain on S = T^T
        # yields the transposed bank directly.  Reuse each squaring:
        # A @ (I - A) = A - A@A, and A@A is the next order's power and the
        # low-pass input.  Kept in f32: repeated squaring amplifies rounding.
        wavelets = []
        adj_power = s
        adj_power_sq = None           # == adj_power @ adj_power, when known
        for order in wavelet_orders:
            if order == 0:
                wavelets.append(eye[None] - s)
                continue
            if order > 1:
                if adj_power_sq is None:
                    adj_power_sq = mm(adj_power, adj_power)
                adj_power, adj_power_sq = adj_power_sq, None
            if adj_power_sq is None:
                adj_power_sq = mm(adj_power, adj_power)
            wavelets.append(adj_power - adj_power_sq)
        if adj_power_sq is None:
            adj_power_sq = mm(adj_power, adj_power)
        low_pass = mm(adj_power_sq, adj_power_sq)       # (reference low_pass)^T

        # Stack the transposed bank along the LANE axis: one
        # (rows, N) @ (N, num_w*N) MXU matmul per scattering level.
        w_stack = jnp.concatenate(wavelets, axis=-1).astype(data_dtype)
        low_pass = low_pass.astype(data_dtype)

        # Scattering tree with incremental windowed projection.  `slab` holds
        # the current level's paths transposed (rows = path*channel, lanes = N).
        # Row order is wavelet-major / previous-row-minor (cheapest in-kernel:
        # tile-aligned lane slices + sublane concat); the wrapper undoes the
        # path permutation with one static gather.
        slab = x.astype(data_dtype)                     # level 0: identity path
        off = 0
        for lvl in range(level + 1):
            rows = slab.shape[1]
            # windowed scattering coeffs for this level: (low_pass @ basis_l)^T
            proj = mm(slab, low_pass)                   # (Bb, rows, N), f32
            out_ref[:, off:off + rows, :] = proj.astype(out_ref.dtype)
            off += rows
            if lvl == level:
                break
            y = jnp.abs(mm(slab, w_stack))              # (Bb, rows, num_w*N)
            y = y.astype(data_dtype)
            slab = jnp.concatenate(
                [y[:, :, j * n:(j + 1) * n] for j in range(num_w)], axis=1)

    return kernel


# ---------------------------------------------------------------------------
# Plain-JAX glue
# ---------------------------------------------------------------------------
def _no_zero_adj(adj):
    """Vectorized equivalent of Wavelet.no_zero_adj."""

    def fix_one(a):
        n = a.shape[0]
        zero_mask = jnp.sum(a, axis=-1) == 0.0
        idx = jnp.arange(n)
        prev_idx = lax.cummax(jnp.where(zero_mask, -1, idx))
        next_idx = lax.cummin(jnp.where(zero_mask, n, idx), reverse=True)
        src = jnp.where(prev_idx >= 0, prev_idx, next_idx)
        src = jnp.clip(src, 0, n - 1)
        a_fixed = jnp.where(zero_mask[:, None], a[src], a)
        a_fixed = 0.5 * (a_fixed + a_fixed.T)
        # PyTorch only symmetrizes batches that actually had zero rows.
        return jnp.where(jnp.any(zero_mask), a_fixed, a)

    return jax.vmap(fix_one)(adj)


def _output_row_gather(c, num_w, level):
    """Static map from PyTorch (channel, global-path) position -> kernel row."""
    num_basis = sum(num_w ** l for l in range(level + 1))
    src = np.empty((c, num_basis), dtype=np.int32)
    row_off = 0
    basis_off = 0
    for l in range(level + 1):
        p_cnt = num_w ** l
        for p in range(p_cnt):
            # kernel builds levels wavelet-major, so its in-level path index is
            # the base-num_w digit reversal of PyTorch's input-major index.
            q, t = 0, p
            for _ in range(l):
                q = q * num_w + (t % num_w)
                t //= num_w
            for ch in range(c):
                src[ch, basis_off + p] = row_off + q * c + ch
        row_off += p_cnt * c
        basis_off += p_cnt
    return src.reshape(-1)


def _tpu_generation():
    try:
        kind = jax.devices()[0].device_kind
    except Exception:
        return 0
    m = re.search(r"(\d+)", kind)
    return int(m.group(1)) if m else 0


def _vmem_limit_bytes(gen):
    if gen >= 7:
        return 48 << 20     # v7x: 64 MiB physical VMEM per TensorCore
    if gen in (5, 6):
        return 96 << 20     # v5e / v6e: 128 MiB physical VMEM
    return 64 << 20


def _per_elem_vmem_bytes(n, c, num_w, level, data_path_bf16):
    """Rough per-batch-element working set (f32-conservative)."""
    num_basis = sum(num_w ** l for l in range(level + 1))
    r_total = num_basis * c
    r_last = c * num_w ** level
    op = (2 * num_w + 6) * n * n * 4                   # S, powers, wavelets, stack, low_pass
    data = (3 * r_last + r_total) * n * 4              # y, slabs, projections
    io = 2 * (n * n + n + c * n + r_total * n) * 4     # double-buffered in/out blocks
    return op + data + io


def _pick_batch_block(b, per_elem_bytes, gen):
    """Largest divisor of b whose per-step working set fits the generation budget."""
    if gen >= 7:
        budget = 28 << 20
    elif gen in (5, 6):
        budget = 40 << 20
    else:
        budget = 24 << 20
    best = 1
    for d in range(2, b + 1):
        if b % d != 0 or d * per_elem_bytes > budget:
            continue
        if gen >= 7 and (b // d) < 2:
            # keep >= 2 grid steps so both v7x TensorCores get work
            continue
        best = d
    return best


# ---------------------------------------------------------------------------
# Forward
# ---------------------------------------------------------------------------
def wavelet_forward(x, adj, wavelet=(0, 1, 2), level=2, data_path_bf16=None):
    """Equivalent of Wavelet(wavelet, level).forward(x, adj, windowed=True).

    x:   (B, C, N),  adj: (B, N, N)
    returns (B, N, C, num_basis), num_basis = sum(len(wavelet)**l, l=0..level)
    """
    gen = _tpu_generation()
    if data_path_bf16 is None:
        data_path_bf16 = gen >= 6      # bf16-native MXU data path on v6e / v7x
    return _wavelet_forward(x, adj, tuple(wavelet), int(level),
                            bool(data_path_bf16), int(gen))


@functools.partial(jax.jit, static_argnums=(2, 3, 4, 5))
def _wavelet_forward(x, adj, wavelet, level, data_path_bf16, gen):
    b, c, n = x.shape
    num_w = len(wavelet)
    num_basis = sum(num_w ** l for l in range(level + 1))
    r_total = num_basis * c

    adj = _no_zero_adj(adj.astype(jnp.float32))
    # TODO(synk): PyTorch raises ValueError on isolated nodes (degree == 0); a
    # kernel cannot raise, so zero degrees are guarded to 0 (matching the
    # reference's D_inverse inf -> 0 fixup) instead of erroring.
    deg = jnp.sum(adj, axis=-1)
    inv_deg = jnp.where(deg > 0.0, 1.0 / deg, 0.0)[:, :, None]   # (B, N, 1)
    adj_t = jnp.swapaxes(adj, 1, 2)                              # A^T (layout only)
    x = x.astype(jnp.float32)

    per_elem = _per_elem_vmem_bytes(n, c, num_w, level, data_path_bf16)
    bb = _pick_batch_block(b, per_elem, gen)

    kernel = _make_wavelet_kernel(wavelet, level, data_path_bf16)
    out_t = pl.pallas_call(
        kernel,
        out_shape=jax.ShapeDtypeStruct((b, r_total, n), jnp.float32),
        grid_spec=pltpu.PrefetchScalarGridSpec(
            num_scalar_prefetch=0,
            grid=(b // bb,),
            in_specs=[
                pl.BlockSpec((bb, n, n), lambda i: (i, 0, 0)),
                pl.BlockSpec((bb, n, 1), lambda i: (i, 0, 0)),
                pl.BlockSpec((bb, c, n), lambda i: (i, 0, 0)),
            ],
            out_specs=pl.BlockSpec((bb, r_total, n), lambda i: (i, 0, 0)),
        ),
        compiler_params=pltpu.CompilerParams(
            dimension_semantics=("parallel",),
            vmem_limit_bytes=_vmem_limit_bytes(gen),
        ),
    )(adj_t, inv_deg, x)

    # (B, R_total, N) -> (B, N, C, num_basis) in the PyTorch path order.
    out = jnp.transpose(out_t, (0, 2, 1))                        # (B, N, R_total)
    gather = jnp.asarray(_output_row_gather(c, num_w, level))
    out = jnp.take(out, gather, axis=-1)
    return out.reshape(b, n, c, num_basis)


# ---------------------------------------------------------------------------
# Pure-JAX reference (direct transcription of the PyTorch module)
# ---------------------------------------------------------------------------
def _wavelet_reference(x, adj, wavelet=(0, 1, 2), level=2):
    adj = _no_zero_adj(adj.astype(jnp.float32))
    n = adj.shape[-1]
    deg = jnp.sum(adj, axis=-1)
    inv_deg = jnp.where(deg > 0.0, 1.0 / deg, 0.0)
    eye = jnp.eye(n, dtype=jnp.float32)[None]
    lap = eye * deg[:, :, None] - adj
    t = 0.5 * (eye + lap * inv_deg[:, None, :])
    wavelets = []
    adj_power = t
    for order in wavelet:
        if order == 0:
            wavelets.append(eye - t)
            continue
        if order > 1:
            adj_power = adj_power @ adj_power
        wavelets.append(adj_power @ (eye - adj_power))
    low_pass = adj_power @ adj_power
    low_pass = low_pass @ low_pass
    outputs = [[jnp.swapaxes(x.astype(jnp.float32), 1, 2)]]
    for _ in range(level):
        layer = []
        for inp in outputs[-1]:
            for w in wavelets:
                layer.append(jnp.abs(w @ inp))
        outputs.append(layer)
    basis = jnp.concatenate([jnp.stack(layer, axis=-1) for layer in outputs],
                            axis=-1)                             # (B, N, C, nb)
    shp = basis.shape
    coeff = low_pass @ basis.reshape(shp[0], shp[1], -1)
    return coeff.reshape(shp)


if __name__ == "__main__":
    key = jax.random.PRNGKey(0)
    B, C, N = 2, 4, 16

    kx, ka = jax.random.split(key)
    x = jax.random.normal(kx, (B, C, N), dtype=jnp.float32)

    a = jax.random.uniform(ka, (B, N, N), dtype=jnp.float32)
    adj = 0.5 * (a + jnp.swapaxes(a, 1, 2))
    adj = adj * (1.0 - jnp.eye(N, dtype=jnp.float32))            # zero diagonal
    # isolated node in batch 0 exercises the no_zero_adj path
    adj = adj.at[0, 3, :].set(0.0).at[0, :, 3].set(0.0)

    num_basis = 1 + 3 + 9                                        # wavelet=(0,1,2), level=2

    # f32 data path: parity check against the pure-JAX reference
    out = jax.block_until_ready(wavelet_forward(x, adj, data_path_bf16=False))
    with jax.default_matmul_precision("highest"):
        ref = jax.block_until_ready(_wavelet_reference(x, adj))
    assert out.shape == (B, N, C, num_basis), out.shape
    assert jnp.all(jnp.isfinite(out))
    assert jnp.allclose(out, ref, rtol=3e-2, atol=3e-2), float(
        jnp.max(jnp.abs(out - ref)))

    # default config (bf16 data path auto-enabled on v6e / v7x)
    out_default = jax.block_until_ready(wavelet_forward(x, adj))
    assert out_default.shape == (B, N, C, num_basis)
    assert jnp.all(jnp.isfinite(out_default))

    print("KERNEL_OK")
</pallas_src>

<mosaic_0001>
module attributes {stable_mosaic.version = 11 : i64} {
  func.func @kernel(%arg0: i32, %arg1: memref<2x16x16xf32, #tpu.memory_space<vmem>>, %arg2: memref<2x16x1xf32, #tpu.memory_space<vmem>>, %arg3: memref<2x4x16xf32, #tpu.memory_space<vmem>>, %arg4: memref<2x52x16xf32, #tpu.memory_space<vmem>>) attributes {dimension_semantics = [#tpu.dimension_semantics<parallel>], iteration_bounds = array<i64: 1>, scalar_prefetch = 0 : i64, scratch_operands = 0 : i64, tpu.core_type = #tpu.core_type<tc>, window_params = [{transform_indices = @transform_0, window_bounds = array<i64: 2, 16, 16>}, {transform_indices = @transform_1, window_bounds = array<i64: 2, 16, 1>}, {transform_indices = @transform_2, window_bounds = array<i64: 2, 4, 16>}, {transform_indices = @transform_3, window_bounds = array<i64: 2, 52, 16>}]} {
    %c0 = arith.constant 0 : index
    %c0_0 = arith.constant 0 : index
    %c0_1 = arith.constant 0 : index
    %0 = vector.load %arg1[%c0, %c0_0, %c0_1] : memref<2x16x16xf32, #tpu.memory_space<vmem>>, vector<2x16x16xf32>
    %c0_2 = arith.constant 0 : index
    %c0_3 = arith.constant 0 : index
    %c0_4 = arith.constant 0 : index
    %1 = vector.load %arg2[%c0_2, %c0_3, %c0_4] : memref<2x16x1xf32, #tpu.memory_space<vmem>>, vector<2x16x1xf32>
    %c0_5 = arith.constant 0 : index
    %c0_6 = arith.constant 0 : index
    %c0_7 = arith.constant 0 : index
    %2 = vector.load %arg3[%c0_5, %c0_6, %c0_7] : memref<2x4x16xf32, #tpu.memory_space<vmem>>, vector<2x4x16xf32>
    %3 = tpu.iota {dimensions = array<i32: 0>} : vector<16x16xi32>
    %4 = tpu.iota {dimensions = array<i32: 1>} : vector<16x16xi32>
    %5 = arith.cmpi eq, %3, %4 : vector<16x16xi32>
    %6 = arith.extui %5 : vector<16x16xi1> to vector<16x16xi32>
    %7 = arith.sitofp %6 : vector<16x16xi32> to vector<16x16xf32>
    %8 = vector.shape_cast %7 : vector<16x16xf32> to vector<1x16x16xf32>
    %cst = arith.constant 5.000000e-01 : f32
    %9 = vector.broadcast %cst : f32 to vector<2x16x1xf32>
    %10 = arith.mulf %9, %1 : vector<2x16x1xf32>
    %11 = vector.broadcast %10 : vector<2x16x1xf32> to vector<2x16x16xf32>
    %12 = arith.mulf %11, %0 : vector<2x16x16xf32>
    %13 = vector.broadcast %8 : vector<1x16x16xf32> to vector<2x16x16xf32>
    %14 = arith.subf %13, %12 : vector<2x16x16xf32>
    %15 = vector.shape_cast %7 : vector<16x16xf32> to vector<1x16x16xf32>
    %16 = vector.broadcast %15 : vector<1x16x16xf32> to vector<2x16x16xf32>
    %17 = arith.subf %16, %14 : vector<2x16x16xf32>
    "tpu.trace_start"() <{level = 10 : i32, message = "bij,bjk->bik"}> : () -> ()
    %cst_8 = arith.constant dense<0.000000e+00> : vector<2x16x16xf32>
    %18 = tpu.matmul %14, %14, %cst_8 {dimension_numbers = #tpu.dot_dimension_numbers<[2], [1], [1], [2], [0, 0, 0, 1, 1, 2], [0], [0]>} : vector<2x16x16xf32>, vector<2x16x16xf32>, vector<2x16x16xf32> -> vector<2x16x16xf32>
    "tpu.trace_stop"() : () -> ()
    %19 = arith.subf %14, %18 : vector<2x16x16xf32>
    "tpu.trace_start"() <{level = 10 : i32, message = "bij,bjk->bik"}> : () -> ()
    %cst_9 = arith.constant dense<0.000000e+00> : vector<2x16x16xf32>
    %20 = tpu.matmul %18, %18, %cst_9 {dimension_numbers = #tpu.dot_dimension_numbers<[2], [1], [1], [2], [0, 0, 0, 1, 1, 2], [0], [0]>} : vector<2x16x16xf32>, vector<2x16x16xf32>, vector<2x16x16xf32> -> vector<2x16x16xf32>
    "tpu.trace_stop"() : () -> ()
    %21 = arith.subf %18, %20 : vector<2x16x16xf32>
    "tpu.trace_start"() <{level = 10 : i32, message = "bij,bjk->bik"}> : () -> ()
    %cst_10 = arith.constant dense<0.000000e+00> : vector<2x16x16xf32>
    %22 = tpu.matmul %20, %20, %cst_10 {dimension_numbers = #tpu.dot_dimension_numbers<[2], [1], [1], [2], [0, 0, 0, 1, 1, 2], [0], [0]>} : vector<2x16x16xf32>, vector<2x16x16xf32>, vector<2x16x16xf32> -> vector<2x16x16xf32>
    "tpu.trace_stop"() : () -> ()
    %23 = tpu.concatenate %17, %19, %21 in 2 : vector<2x16x16xf32>, vector<2x16x16xf32>, vector<2x16x16xf32> -> vector<2x16x48xf32>
    "tpu.trace_start"() <{level = 10 : i32, message = "bij,bjk->bik"}> : () -> ()
    %cst_11 = arith.constant dense<0.000000e+00> : vector<2x4x16xf32>
    %24 = tpu.matmul %2, %22, %cst_11 {dimension_numbers = #tpu.dot_dimension_numbers<[2], [1], [1], [2], [0, 0, 0, 1, 1, 2], [0], [0]>} : vector<2x4x16xf32>, vector<2x16x16xf32>, vector<2x4x16xf32> -> vector<2x4x16xf32>
    "tpu.trace_stop"() : () -> ()
    %c0_12 = arith.constant 0 : index
    %c0_13 = arith.constant 0 : index
    %c0_14 = arith.constant 0 : index
    %25 = vector.load %arg4[%c0_12, %c0_13, %c0_14] : memref<2x52x16xf32, #tpu.memory_space<vmem>>, vector<2x4x16xf32>
    tpu.vector_store %arg4[%c0_12, %c0_13, %c0_14], %24 {strides = array<i32>} : memref<2x52x16xf32, #tpu.memory_space<vmem>>, vector<2x4x16xf32>,
    "tpu.trace_start"() <{level = 10 : i32, message = "bij,bjk->bik"}> : () -> ()
    %cst_15 = arith.constant dense<0.000000e+00> : vector<2x4x48xf32>
    %26 = tpu.matmul %2, %23, %cst_15 {dimension_numbers = #tpu.dot_dimension_numbers<[2], [1], [1], [2], [0, 0, 0, 1, 1, 2], [0], [0]>} : vector<2x4x16xf32>, vector<2x16x48xf32>, vector<2x4x48xf32> -> vector<2x4x48xf32>
    "tpu.trace_stop"() : () -> ()
    %27 = math.absf %26 : vector<2x4x48xf32>
    %28 = vector.extract_strided_slice %27 {offsets = [0, 0, 0], sizes = [2, 4, 16], strides = [1, 1, 1]} : vector<2x4x48xf32> to vector<2x4x16xf32>
    %29 = vector.extract_strided_slice %27 {offsets = [0, 0, 16], sizes = [2, 4, 16], strides = [1, 1, 1]} : vector<2x4x48xf32> to vector<2x4x16xf32>
    %30 = vector.extract_strided_slice %27 {offsets = [0, 0, 32], sizes = [2, 4, 16], strides = [1, 1, 1]} : vector<2x4x48xf32> to vector<2x4x16xf32>
    %31 = tpu.concatenate %28, %29, %30 in 1 : vector<2x4x16xf32>, vector<2x4x16xf32>, vector<2x4x16xf32> -> vector<2x12x16xf32>
    "tpu.trace_start"() <{level = 10 : i32, message = "bij,bjk->bik"}> : () -> ()
    %cst_16 = arith.constant dense<0.000000e+00> : vector<2x12x16xf32>
    %32 = tpu.matmul %31, %22, %cst_16 {dimension_numbers = #tpu.dot_dimension_numbers<[2], [1], [1], [2], [0, 0, 0, 1, 1, 2], [0], [0]>} : vector<2x12x16xf32>, vector<2x16x16xf32>, vector<2x12x16xf32> -> vector<2x12x16xf32>
    "tpu.trace_stop"() : () -> ()
    %c0_17 = arith.constant 0 : index
    %c4 = arith.constant 4 : index
    %c0_18 = arith.constant 0 : index
    %33 = vector.load %arg4[%c0_17, %c4, %c0_18] : memref<2x52x16xf32, #tpu.memory_space<vmem>>, vector<2x12x16xf32>
    tpu.vector_store %arg4[%c0_17, %c4, %c0_18], %32 {strides = array<i32>} : memref<2x52x16xf32, #tpu.memory_space<vmem>>, vector<2x12x16xf32>,
    "tpu.trace_start"() <{level = 10 : i32, message = "bij,bjk->bik"}> : () -> ()
    %cst_19 = arith.constant dense<0.000000e+00> : vector<2x12x48xf32>
    %34 = tpu.matmul %31, %23, %cst_19 {dimension_numbers = #tpu.dot_dimension_numbers<[2], [1], [1], [2], [0, 0, 0, 1, 1, 2], [0], [0]>} : vector<2x12x16xf32>, vector<2x16x48xf32>, vector<2x12x48xf32> -> vector<2x12x48xf32>
    "tpu.trace_stop"() : () -> ()
    %35 = math.absf %34 : vector<2x12x48xf32>
    %36 = vector.extract_strided_slice %35 {offsets = [0, 0, 0], sizes = [2, 12, 16], strides = [1, 1, 1]} : vector<2x12x48xf32> to vector<2x12x16xf32>
    %37 = vector.extract_strided_slice %35 {offsets = [0, 0, 16], sizes = [2, 12, 16], strides = [1, 1, 1]} : vector<2x12x48xf32> to vector<2x12x16xf32>
    %38 = vector.extract_strided_slice %35 {offsets = [0, 0, 32], sizes = [2, 12, 16], strides = [1, 1, 1]} : vector<2x12x48xf32> to vector<2x12x16xf32>
    %39 = tpu.concatenate %36, %37, %38 in 1 : vector<2x12x16xf32>, vector<2x12x16xf32>, vector<2x12x16xf32> -> vector<2x36x16xf32>
    "tpu.trace_start"() <{level = 10 : i32, message = "bij,bjk->bik"}> : () -> ()
    %cst_20 = arith.constant dense<0.000000e+00> : vector<2x36x16xf32>
    %40 = tpu.matmul %39, %22, %cst_20 {dimension_numbers = #tpu.dot_dimension_numbers<[2], [1], [1], [2], [0, 0, 0, 1, 1, 2], [0], [0]>} : vector<2x36x16xf32>, vector<2x16x16xf32>, vector<2x36x16xf32> -> vector<2x36x16xf32>
    "tpu.trace_stop"() : () -> ()
    %c0_21 = arith.constant 0 : index
    %c16 = arith.constant 16 : index
    %c0_22 = arith.constant 0 : index
    %41 = vector.load %arg4[%c0_21, %c16, %c0_22] : memref<2x52x16xf32, #tpu.memory_space<vmem>>, vector<2x36x16xf32>
    tpu.vector_store %arg4[%c0_21, %c16, %c0_22], %40 {strides = array<i32>} : memref<2x52x16xf32, #tpu.memory_space<vmem>>, vector<2x36x16xf32>,
    return
  }
  func.func @transform_0(%arg0: i32) -> (i32, i32, i32) {
    %c0_i32 = arith.constant 0 : i32
    %c0_i32_0 = arith.constant 0 : i32
    %c0_i32_1 = arith.constant 0 : i32
    return %arg0, %c0_i32, %c0_i32_0 : i32, i32, i32
  }
  func.func @transform_1(%arg0: i32) -> (i32, i32, i32) {
    %c0_i32 = arith.constant 0 : i32
    %c0_i32_0 = arith.constant 0 : i32
    %c0_i32_1 = arith.constant 0 : i32
    return %arg0, %c0_i32, %c0_i32_0 : i32, i32, i32
  }
  func.func @transform_2(%arg0: i32) -> (i32, i32, i32) {
    %c0_i32 = arith.constant 0 : i32
    %c0_i32_0 = arith.constant 0 : i32
    %c0_i32_1 = arith.constant 0 : i32
    return %arg0, %c0_i32, %c0_i32_0 : i32, i32, i32
  }
  func.func @transform_3(%arg0: i32) -> (i32, i32, i32) {
    %c0_i32 = arith.constant 0 : i32
    %c0_i32_0 = arith.constant 0 : i32
    %c0_i32_1 = arith.constant 0 : i32
    return %arg0, %c0_i32, %c0_i32_0 : i32, i32, i32
  }
}

</mosaic_0001>

<llo_original>
// kernel: _wavelet_forward.1
$region0: #{_wavelet_forward.1}
  #allocation0 [shape = 'u32[]', space=smem, size = 0x4, offset = 0x4, fixed_abs, tag = 'smem constant byte address 0x4 - core index']
  #allocation1 [shape = 'u32[72,128]{1,0:T(1,128)}', space=vmem, size = 0x9000, scoped, tag = 'internal scratch']
  %s0 = inlined_call_operand.vmem [shape: f32[2,16,16], index: 0, kind: input, shape index: {}]
  %s1 = inlined_call_operand.vmem [shape: f32[2,16,1], index: 1, kind: input, shape index: {}]
  %s2 = inlined_call_operand.vmem [shape: f32[2,4,16], index: 2, kind: input, shape index: {}]
  %s3 = inlined_call_operand.vmem [shape: f32[2,52,16], index: 3, kind: output, shape index: {}]
  %s4 = sld [smem:[#allocation0]]
  $region22: #{_wavelet_forward.1} parent=0
    _
  %s6 = ssub.s32 1, %s4
  %s7 = scalar_select 0, %s6, %s4
  // Predicated region
  $region2: #{_wavelet_forward.1} parent=0 // pred_check
    _
  $region3: #{_wavelet_forward.1} parent=0 // pred_check_branch
    %9 = sbr.rel (0) target = $region5
  $region4: #{_wavelet_forward.1} parent=0 // pred_region
    _
  $region5: #{_wavelet_forward.1} parent=0 // pred_fallthru
    _
  // Predicated region
  $region6: #{_wavelet_forward.1} parent=0 // pred_check
    _
  $region7: #{_wavelet_forward.1} parent=0 // pred_check_branch
    %11 = sbr.rel (0) target = $region9
  $region8: #{_wavelet_forward.1} parent=0 // pred_region
    _
  $region9: #{_wavelet_forward.1} parent=0 // pred_fallthru
    _
  // Predicated region
  $region10: #{_wavelet_forward.1} parent=0 // pred_check
    _
  $region11: #{_wavelet_forward.1} parent=0 // pred_check_branch
    %13 = sbr.rel (0) target = $region13
  $region12: #{_wavelet_forward.1} parent=0 // pred_region
    _
  $region13: #{_wavelet_forward.1} parent=0 // pred_fallthru
    _
  %v14 = vld [vmem:[%s0] sm:$0xff]
  %v15 = vld [vmem:[%s0 + $0x8] sm:$0xff]
  %v16 = vld [vmem:[%s0 + $0x10] sm:$0xff]
  %v17 = vld [vmem:[%s0 + $0x18] sm:$0xff]
  %v18 = vld [vmem:[%s1] sm:$0xff]
  %v19 = vld [vmem:[%s1 + $0x8] sm:$0xff]
  %v20 = vld [vmem:[%s1 + $0x10] sm:$0xff]
  %v21 = vld [vmem:[%s1 + $0x18] sm:$0xff]
  %v22 = vld [vmem:[%s2] sm:$0xf]
  %v23 = vld [vmem:[%s2 + $0x4] sm:$0xf]
  %v24 = vlaneseq
  %v25 = vshrl.u32 %v24, 7
  %v26 = vadd.s32 %v25, 8
  %v27 = vlaneseq
  %v28 = vand.u32 %v27, 127
  %vm29 = vcmp.eq.s32.totalorder %v25, %v28
  %vm30 = vcmp.eq.s32.totalorder %v26, %v28
  %v31 = vsel %vm29, 1, 0
  %v32 = vsel %vm30, 1, 0
  %v33 = vcvt.s32.f32 %v31
  %v34 = vcvt.s32.f32 %v32
  %v35 = vmul.f32 %v18, 0.5
  %v36 = vmul.f32 %v19, 0.5
  %v37 = vmul.f32 %v20, 0.5
  %v38 = vmul.f32 %v21, 0.5
  %40 = vset.pattern.permute.xlu0 0
  %41 = vperm.xlu0 %40, %v35
  %v42 = vpop.permute.xlu0 %41
  %45 = vset.pattern.permute.xlu0 0
  %46 = vperm.xlu0 %45, %v36
  %v47 = vpop.permute.xlu0 %46
  %50 = vset.pattern.permute.xlu0 0
  %51 = vperm.xlu0 %50, %v37
  %v52 = vpop.permute.xlu0 %51
  %55 = vset.pattern.permute.xlu0 0
  %56 = vperm.xlu0 %55, %v38
  %v57 = vpop.permute.xlu0 %56
  %v59 = vmul.f32 %v42, %v14
  %v60 = vmul.f32 %v47, %v15
  %v61 = vmul.f32 %v52, %v16
  %v62 = vmul.f32 %v57, %v17
  %v63 = vsub.f32 %v33, %v59
  %v64 = vsub.f32 %v34, %v60
  %v65 = vsub.f32 %v33, %v61
  %v66 = vsub.f32 %v34, %v62
  %v67 = vsub.f32 %v33, %v63
  %v68 = vsub.f32 %v34, %v64
  %v69 = vsub.f32 %v33, %v65
  %v70 = vsub.f32 %v34, %v66
  %vm71 = vcmask 130048
  %v73 = vsel %vm71, %v63, 0
  %v76 = vsel %vm71, %v64, 0
  %78 = vmatpush.msra.mxu0 0.0
  %79 = vmatpush.msra.mxu0 0.0
  %80 = vmatpush.msra.mxu0 0.0
  %81 = vmatpush.msra.mxu0 0.0
  %82 = vmatpush.msra.mxu0 0.0
  %83 = vmatpush.msra.mxu0 0.0
  %84 = vmatpush.msra.mxu0 0.0
  %85 = vmatpush.msra.mxu0 0.0
  %86 = vmatpush.msra.mxu0 0.0
  %87 = vmatpush.msra.mxu0 0.0
  %88 = vmatpush.msra.mxu0 0.0
  %89 = vmatpush.msra.mxu0 0.0
  %90 = vmatpush.msra.mxu0 0.0
  %91 = vmatpush.msra.mxu0 0.0
  %92 = vmatpush.msra.mxu0 %v64
  %93 = vmatpush.msra.mxu0 %v63
  %94 = vmatmul.f32.gmra.mxu0 %v73
  %v95 = vpop.f32.mrf.mxu0
  %v96 = vadd.f32 0.0, %v95
  %97 = vmatmul.f32.gmra.mxu0 %v76
  %v98 = vpop.f32.mrf.mxu0
  %v99 = vadd.f32 0.0, %v98
  %100 = vdwg.mxu0
  %v102 = vsel %vm71, %v65, 0
  %v105 = vsel %vm71, %v66, 0
  %107 = vmatpush.msra.mxu0 0.0
  %108 = vmatpush.msra.mxu0 0.0
  %109 = vmatpush.msra.mxu0 0.0
  %110 = vmatpush.msra.mxu0 0.0
  %111 = vmatpush.msra.mxu0 0.0
  %112 = vmatpush.msra.mxu0 0.0
  %113 = vmatpush.msra.mxu0 0.0
  %114 = vmatpush.msra.mxu0 0.0
  %115 = vmatpush.msra.mxu0 0.0
  %116 = vmatpush.msra.mxu0 0.0
  %117 = vmatpush.msra.mxu0 0.0
  %118 = vmatpush.msra.mxu0 0.0
  %119 = vmatpush.msra.mxu0 0.0
  %120 = vmatpush.msra.mxu0 0.0
  %121 = vmatpush.msra.mxu0 %v66
  %122 = vmatpush.msra.mxu0 %v65
  %123 = vmatmul.f32.gmra.mxu0 %v102
  %v124 = vpop.f32.mrf.mxu0
  %v125 = vadd.f32 0.0, %v124
  %126 = vmatmul.f32.gmra.mxu0 %v105
  %v127 = vpop.f32.mrf.mxu0
  %v128 = vadd.f32 0.0, %v127
  %129 = vdwg.mxu0
  %v130 = vsub.f32 %v63, %v96
  %v131 = vsub.f32 %v64, %v99
  %v132 = vsub.f32 %v65, %v125
  %v133 = vsub.f32 %v66, %v128
  %v135 = vsel %vm71, %v96, 0
  %v138 = vsel %vm71, %v99, 0
  %140 = vmatpush.msra.mxu0 0.0
  %141 = vmatpush.msra.mxu0 0.0
  %142 = vmatpush.msra.mxu0 0.0
  %143 = vmatpush.msra.mxu0 0.0
  %144 = vmatpush.msra.mxu0 0.0
  %145 = vmatpush.msra.mxu0 0.0
  %146 = vmatpush.msra.mxu0 0.0
  %147 = vmatpush.msra.mxu0 0.0
  %148 = vmatpush.msra.mxu0 0.0
  %149 = vmatpush.msra.mxu0 0.0
  %150 = vmatpush.msra.mxu0 0.0
  %151 = vmatpush.msra.mxu0 0.0
  %152 = vmatpush.msra.mxu0 0.0
  %153 = vmatpush.msra.mxu0 0.0
  %154 = vmatpush.msra.mxu0 %v99
  %155 = vmatpush.msra.mxu0 %v96
  %156 = vmatmul.f32.gmra.mxu0 %v135
  %v157 = vpop.f32.mrf.mxu0
  %v158 = vadd.f32 0.0, %v157
  %159 = vmatmul.f32.gmra.mxu0 %v138
  %v160 = vpop.f32.mrf.mxu0
  %v161 = vadd.f32 0.0, %v160
  %162 = vdwg.mxu0
  %v164 = vsel %vm71, %v125, 0
  %v167 = vsel %vm71, %v128, 0
  %169 = vmatpush.msra.mxu0 0.0
  %170 = vmatpush.msra.mxu0 0.0
  %171 = vmatpush.msra.mxu0 0.0
  %172 = vmatpush.msra.mxu0 0.0
  %173 = vmatpush.msra.mxu0 0.0
  %174 = vmatpush.msra.mxu0 0.0
  %175 = vmatpush.msra.mxu0 0.0
  %176 = vmatpush.msra.mxu0 0.0
  %177 = vmatpush.msra.mxu0 0.0
  %178 = vmatpush.msra.mxu0 0.0
  %179 = vmatpush.msra.mxu0 0.0
  %180 = vmatpush.msra.mxu0 0.0
  %181 = vmatpush.msra.mxu0 0.0
  %182 = vmatpush.msra.mxu0 0.0
  %183 = vmatpush.msra.mxu0 %v128
  %184 = vmatpush.msra.mxu0 %v125
  %185 = vmatmul.f32.gmra.mxu0 %v164
  %v186 = vpop.f32.mrf.mxu0
  %v187 = vadd.f32 0.0, %v186
  %188 = vmatmul.f32.gmra.mxu0 %v167
  %v189 = vpop.f32.mrf.mxu0
  %v190 = vadd.f32 0.0, %v189
  %191 = vdwg.mxu0
  %v192 = vsub.f32 %v96, %v158
  %v193 = vsub.f32 %v99, %v161
  %v194 = vsub.f32 %v125, %v187
  %v195 = vsub.f32 %v128, %v190
  %v197 = vsel %vm71, %v158, 0
  %v200 = vsel %vm71, %v161, 0
  %202 = vmatpush.msra.mxu0 0.0
  %203 = vmatpush.msra.mxu0 0.0
  %204 = vmatpush.msra.mxu0 0.0
  %205 = vmatpush.msra.mxu0 0.0
  %206 = vmatpush.msra.mxu0 0.0
  %207 = vmatpush.msra.mxu0 0.0
  %208 = vmatpush.msra.mxu0 0.0
  %209 = vmatpush.msra.mxu0 0.0
  %210 = vmatpush.msra.mxu0 0.0
  %211 = vmatpush.msra.mxu0 0.0
  %212 = vmatpush.msra.mxu0 0.0
  %213 = vmatpush.msra.mxu0 0.0
  %214 = vmatpush.msra.mxu0 0.0
  %215 = vmatpush.msra.mxu0 0.0
  %216 = vmatpush.msra.mxu0 %v161
  %217 = vmatpush.msra.mxu0 %v158
  %218 = vmatmul.f32.gmra.mxu0 %v197
  %v219 = vpop.f32.mrf.mxu0
  %v220 = vadd.f32 0.0, %v219
  %221 = vmatmul.f32.gmra.mxu0 %v200
  %v222 = vpop.f32.mrf.mxu0
  %v223 = vadd.f32 0.0, %v222
  %224 = vdwg.mxu0
  %v226 = vsel %vm71, %v187, 0
  %v229 = vsel %vm71, %v190, 0
  %231 = vmatpush.msra.mxu0 0.0
  %232 = vmatpush.msra.mxu0 0.0
  %233 = vmatpush.msra.mxu0 0.0
  %234 = vmatpush.msra.mxu0 0.0
  %235 = vmatpush.msra.mxu0 0.0
  %236 = vmatpush.msra.mxu0 0.0
  %237 = vmatpush.msra.mxu0 0.0
  %238 = vmatpush.msra.mxu0 0.0
  %239 = vmatpush.msra.mxu0 0.0
  %240 = vmatpush.msra.mxu0 0.0
  %241 = vmatpush.msra.mxu0 0.0
  %242 = vmatpush.msra.mxu0 0.0
  %243 = vmatpush.msra.mxu0 0.0
  %244 = vmatpush.msra.mxu0 0.0
  %245 = vmatpush.msra.mxu0 %v190
  %246 = vmatpush.msra.mxu0 %v187
  %247 = vmatmul.f32.gmra.mxu0 %v226
  %v248 = vpop.f32.mrf.mxu0
  %v249 = vadd.f32 0.0, %v248
  %250 = vmatmul.f32.gmra.mxu0 %v229
  %v251 = vpop.f32.mrf.mxu0
  %v252 = vadd.f32 0.0, %v251
  %253 = vdwg.mxu0
  %258 = vrot.lane.b32.xlu0 %v130, 16
  %v259 = vpop.permute.xlu0 %258
  %260 = vrot.lane.b32.xlu0 %v131, 16
  %v261 = vpop.permute.xlu0 %260
  %262 = vrot.lane.b32.xlu0 %v132, 16
  %v263 = vpop.permute.xlu0 %262
  %264 = vrot.lane.b32.xlu0 %v133, 16
  %v265 = vpop.permute.xlu0 %264
  %274 = vrot.lane.b32.xlu0 %v192, 32
  %v275 = vpop.permute.xlu0 %274
  %276 = vrot.lane.b32.xlu0 %v193, 32
  %v277 = vpop.permute.xlu0 %276
  %278 = vrot.lane.b32.xlu0 %v194, 32
  %v279 = vpop.permute.xlu0 %278
  %280 = vrot.lane.b32.xlu0 %v195, 32
  %v281 = vpop.permute.xlu0 %280
  %v286 = vsel %vm71, %v67, %v259
  %v287 = vsel %vm71, %v68, %v261
  %v288 = vsel %vm71, %v69, %v263
  %v289 = vsel %vm71, %v70, %v265
  %vm290 = vcmask 261120
  %v291 = vsel %vm290, %v286, %v275
  %v292 = vsel %vm290, %v287, %v277
  %v293 = vsel %vm290, %v288, %v279
  %v294 = vsel %vm290, %v289, %v281
  %v296 = vsel %vm71, %v22, 0
  %298 = vmatpush.msra.mxu0 0.0
  %299 = vmatpush.msra.mxu0 0.0
  %300 = vmatpush.msra.mxu0 0.0
  %301 = vmatpush.msra.mxu0 0.0
  %302 = vmatpush.msra.mxu0 0.0
  %303 = vmatpush.msra.mxu0 0.0
  %304 = vmatpush.msra.mxu0 0.0
  %305 = vmatpush.msra.mxu0 0.0
  %306 = vmatpush.msra.mxu0 0.0
  %307 = vmatpush.msra.mxu0 0.0
  %308 = vmatpush.msra.mxu0 0.0
  %309 = vmatpush.msra.mxu0 0.0
  %310 = vmatpush.msra.mxu0 0.0
  %311 = vmatpush.msra.mxu0 0.0
  %312 = vmatpush.msra.mxu0 %v223
  %313 = vmatpush.msra.mxu0 %v220
  %314 = vmatmul.f32.gmra.mxu0 %v296
  %v315 = vpop.f32.mrf.mxu0
  %v316 = vadd.f32 0.0, %v315
  %317 = vdwg.mxu0
  %v319 = vsel %vm71, %v23, 0
  %321 = vmatpush.msra.mxu0 0.0
  %322 = vmatpush.msra.mxu0 0.0
  %323 = vmatpush.msra.mxu0 0.0
  %324 = vmatpush.msra.mxu0 0.0
  %325 = vmatpush.msra.mxu0 0.0
  %326 = vmatpush.msra.mxu0 0.0
  %327 = vmatpush.msra.mxu0 0.0
  %328 = vmatpush.msra.mxu0 0.0
  %329 = vmatpush.msra.mxu0 0.0
  %330 = vmatpush.msra.mxu0 0.0
  %331 = vmatpush.msra.mxu0 0.0
  %332 = vmatpush.msra.mxu0 0.0
  %333 = vmatpush.msra.mxu0 0.0
  %334 = vmatpush.msra.mxu0 0.0
  %335 = vmatpush.msra.mxu0 %v252
  %336 = vmatpush.msra.mxu0 %v249
  %337 = vmatmul.f32.gmra.mxu0 %v319
  %v338 = vpop.f32.mrf.mxu0
  %v339 = vadd.f32 0.0, %v338
  %340 = vdwg.mxu0
  %vm341 = vcmask 125952
  %342 = vst.msk [vmem:[%s3] sm:$0xf] %vm341, %v316
  %343 = vst.msk [vmem:[%s3 + $0x38] sm:$0xf] %vm341, %v339
  %344 = vmatpush.msra.mxu0 0.0
  %345 = vmatpush.msra.mxu0 0.0
  %346 = vmatpush.msra.mxu0 0.0
  %347 = vmatpush.msra.mxu0 0.0
  %348 = vmatpush.msra.mxu0 0.0
  %349 = vmatpush.msra.mxu0 0.0
  %350 = vmatpush.msra.mxu0 0.0
  %351 = vmatpush.msra.mxu0 0.0
  %352 = vmatpush.msra.mxu0 0.0
  %353 = vmatpush.msra.mxu0 0.0
  %354 = vmatpush.msra.mxu0 0.0
  %355 = vmatpush.msra.mxu0 0.0
  %356 = vmatpush.msra.mxu0 0.0
  %357 = vmatpush.msra.mxu0 0.0
  %358 = vmatpush.msra.mxu0 %v292
  %359 = vmatpush.msra.mxu0 %v291
  %360 = vmatmul.f32.gmra.mxu0 %v296
  %v361 = vpop.f32.mrf.mxu0
  %v362 = vadd.f32 0.0, %v361
  %363 = vdwg.mxu0
  %364 = vmatpush.msra.mxu0 0.0
  %365 = vmatpush.msra.mxu0 0.0
  %366 = vmatpush.msra.mxu0 0.0
  %367 = vmatpush.msra.mxu0 0.0
  %368 = vmatpush.msra.mxu0 0.0
  %369 = vmatpush.msra.mxu0 0.0
  %370 = vmatpush.msra.mxu0 0.0
  %371 = vmatpush.msra.mxu0 0.0
  %372 = vmatpush.msra.mxu0 0.0
  %373 = vmatpush.msra.mxu0 0.0
  %374 = vmatpush.msra.mxu0 0.0
  %375 = vmatpush.msra.mxu0 0.0
  %376 = vmatpush.msra.mxu0 0.0
  %377 = vmatpush.msra.mxu0 0.0
  %378 = vmatpush.msra.mxu0 %v294
  %379 = vmatpush.msra.mxu0 %v293
  %380 = vmatmul.f32.gmra.mxu0 %v319
  %v381 = vpop.f32.mrf.mxu0
  %v382 = vadd.f32 0.0, %v381
  %383 = vdwg.mxu0
  %v384 = vand.u32 2147483647, %v362
  %v385 = vand.u32 2147483647, %v382
  %v388 = vrot.slane %v384, 4
  %v389 = vrot.slane %v385, 4
  %390 = vrot.lane.b32.xlu0 %v388, 112
  %v391 = vpop.permute.xlu0 %390
  %392 = vrot.lane.b32.xlu0 %v389, 112
  %v393 = vpop.permute.xlu0 %392
  %396 = vrot.lane.b32.xlu0 %v384, 96
  %v397 = vpop.permute.xlu0 %396
  %398 = vrot.lane.b32.xlu0 %v385, 96
  %v399 = vpop.permute.xlu0 %398
  %vm400 = vcmask 1043456
  %v401 = vsel %vm400, %v384, %v391
  %v402 = vsel %vm400, %v385, %v393
  %v404 = vsel %vm71, %v401, 0
  %v406 = vsel %vm71, %v397, 0
  %408 = vmatpush.msra.mxu0 0.0
  %409 = vmatpush.msra.mxu0 0.0
  %410 = vmatpush.msra.mxu0 0.0
  %411 = vmatpush.msra.mxu0 0.0
  %412 = vmatpush.msra.mxu0 0.0
  %413 = vmatpush.msra.mxu0 0.0
  %414 = vmatpush.msra.mxu0 0.0
  %415 = vmatpush.msra.mxu0 0.0
  %416 = vmatpush.msra.mxu0 0.0
  %417 = vmatpush.msra.mxu0 0.0
  %418 = vmatpush.msra.mxu0 0.0
  %419 = vmatpush.msra.mxu0 0.0
  %420 = vmatpush.msra.mxu0 0.0
  %421 = vmatpush.msra.mxu0 0.0
  %422 = vmatpush.msra.mxu0 %v223
  %423 = vmatpush.msra.mxu0 %v220
  %424 = vmatmul.f32.gmra.mxu0 %v404
  %v425 = vpop.f32.mrf.mxu0
  %v426 = vadd.f32 0.0, %v425
  %427 = vmatmul.f32.gmra.mxu0 %v406
  %v428 = vpop.f32.mrf.mxu0
  %v429 = vadd.f32 0.0, %v428
  %430 = vdwg.mxu0
  %v432 = vsel %vm71, %v402, 0
  %v434 = vsel %vm71, %v399, 0
  %436 = vmatpush.msra.mxu0 0.0
  %437 = vmatpush.msra.mxu0 0.0
  %438 = vmatpush.msra.mxu0 0.0
  %439 = vmatpush.msra.mxu0 0.0
  %440 = vmatpush.msra.mxu0 0.0
  %441 = vmatpush.msra.mxu0 0.0
  %442 = vmatpush.msra.mxu0 0.0
  %443 = vmatpush.msra.mxu0 0.0
  %444 = vmatpush.msra.mxu0 0.0
  %445 = vmatpush.msra.mxu0 0.0
  %446 = vmatpush.msra.mxu0 0.0
  %447 = vmatpush.msra.mxu0 0.0
  %448 = vmatpush.msra.mxu0 0.0
  %449 = vmatpush.msra.mxu0 0.0
  %450 = vmatpush.msra.mxu0 %v252
  %451 = vmatpush.msra.mxu0 %v249
  %452 = vmatmul.f32.gmra.mxu0 %v432
  %v453 = vpop.f32.mrf.mxu0
  %v454 = vadd.f32 0.0, %v453
  %455 = vmatmul.f32.gmra.mxu0 %v434
  %v456 = vpop.f32.mrf.mxu0
  %v457 = vadd.f32 0.0, %v456
  %458 = vdwg.mxu0
  %459 = vst.msk [vmem:[%s3 + $0x4] sm:$0xff] %vm71, %v426
  %460 = vst.msk [vmem:[%s3 + $0xc] sm:$0xf] %vm341, %v429
  %461 = vst.msk [vmem:[%s3 + $0x3c] sm:$0xff] %vm71, %v454
  %462 = vst.msk [vmem:[%s3 + $0x44] sm:$0xf] %vm341, %v457
  %463 = vmatpush.msra.mxu0 0.0
  %464 = vmatpush.msra.mxu0 0.0
  %465 = vmatpush.msra.mxu0 0.0
  %466 = vmatpush.msra.mxu0 0.0
  %467 = vmatpush.msra.mxu0 0.0
  %468 = vmatpush.msra.mxu0 0.0
  %469 = vmatpush.msra.mxu0 0.0
  %470 = vmatpush.msra.mxu0 0.0
  %471 = vmatpush.msra.mxu0 0.0
  %472 = vmatpush.msra.mxu0 0.0
  %473 = vmatpush.msra.mxu0 0.0
  %474 = vmatpush.msra.mxu0 0.0
  %475 = vmatpush.msra.mxu0 0.0
  %476 = vmatpush.msra.mxu0 0.0
  %477 = vmatpush.msra.mxu0 %v292
  %478 = vmatpush.msra.mxu0 %v291
  %479 = vmatmul.f32.gmra.mxu0 %v404
  %v480 = vpop.f32.mrf.mxu0
  %v481 = vadd.f32 0.0, %v480
  %482 = vmatmul.f32.gmra.mxu0 %v406
  %v483 = vpop.f32.mrf.mxu0
  %v484 = vadd.f32 0.0, %v483
  %485 = vdwg.mxu0
  %486 = vmatpush.msra.mxu0 0.0
  %487 = vmatpush.msra.mxu0 0.0
  %488 = vmatpush.msra.mxu0 0.0
  %489 = vmatpush.msra.mxu0 0.0
  %490 = vmatpush.msra.mxu0 0.0
  %491 = vmatpush.msra.mxu0 0.0
  %492 = vmatpush.msra.mxu0 0.0
  %493 = vmatpush.msra.mxu0 0.0
  %494 = vmatpush.msra.mxu0 0.0
  %495 = vmatpush.msra.mxu0 0.0
  %496 = vmatpush.msra.mxu0 0.0
  %497 = vmatpush.msra.mxu0 0.0
  %498 = vmatpush.msra.mxu0 0.0
  %499 = vmatpush.msra.mxu0 0.0
  %500 = vmatpush.msra.mxu0 %v294
  %501 = vmatpush.msra.mxu0 %v293
  %502 = vmatmul.f32.gmra.mxu0 %v432
  %v503 = vpop.f32.mrf.mxu0
  %v504 = vadd.f32 0.0, %v503
  %505 = vmatmul.f32.gmra.mxu0 %v434
  %v506 = vpop.f32.mrf.mxu0
  %v507 = vadd.f32 0.0, %v506
  %508 = vdwg.mxu0
  %v509 = vand.u32 2147483647, %v481
  %v510 = vand.u32 2147483647, %v484
  %v511 = vand.u32 2147483647, %v504
  %v512 = vand.u32 2147483647, %v507
  %v517 = vrot.slane %v509, 4
  %v518 = vrot.slane %v510, 4
  %v519 = vsel %vm400, %v517, %v518
  %v520 = vrot.slane %v511, 4
  %v521 = vrot.slane %v512, 4
  %v522 = vsel %vm400, %v520, %v521
  %523 = vrot.lane.b32.xlu0 %v517, 112
  %v524 = vpop.permute.xlu0 %523
  %525 = vrot.lane.b32.xlu0 %v519, 112
  %v526 = vpop.permute.xlu0 %525
  %527 = vrot.lane.b32.xlu0 %v520, 112
  %v528 = vpop.permute.xlu0 %527
  %529 = vrot.lane.b32.xlu0 %v522, 112
  %v530 = vpop.permute.xlu0 %529
  %533 = vrot.lane.b32.xlu0 %v509, 96
  %v534 = vpop.permute.xlu0 %533
  %535 = vrot.lane.b32.xlu0 %v510, 96
  %v536 = vpop.permute.xlu0 %535
  %537 = vrot.lane.b32.xlu0 %v511, 96
  %v538 = vpop.permute.xlu0 %537
  %539 = vrot.lane.b32.xlu0 %v512, 96
  %v540 = vpop.permute.xlu0 %539
  %v541 = vsel %vm400, %v510, %v524
  %v542 = vsel %vm400, %v512, %v528
  %v543 = vsel %vm71, %v509, 0
  %v546 = vsel %vm71, %v541, 0
  %v548 = vsel %vm71, %v526, 0
  %v550 = vsel %vm71, %v534, 0
  %v552 = vsel %vm71, %v536, 0
  %554 = vmatpush.msra.mxu0 0.0
  %555 = vmatpush.msra.mxu0 0.0
  %556 = vmatpush.msra.mxu0 0.0
  %557 = vmatpush.msra.mxu0 0.0
  %558 = vmatpush.msra.mxu0 0.0
  %559 = vmatpush.msra.mxu0 0.0
  %560 = vmatpush.msra.mxu0 0.0
  %561 = vmatpush.msra.mxu0 0.0
  %562 = vmatpush.msra.mxu0 0.0
  %563 = vmatpush.msra.mxu0 0.0
  %564 = vmatpush.msra.mxu0 0.0
  %565 = vmatpush.msra.mxu0 0.0
  %566 = vmatpush.msra.mxu0 0.0
  %567 = vmatpush.msra.mxu0 0.0
  %568 = vmatpush.msra.mxu0 %v223
  %569 = vmatpush.msra.mxu0 %v220
  %570 = vmatmul.f32.gmra.mxu0 %v543
  %v571 = vpop.f32.mrf.mxu0
  %v572 = vadd.f32 0.0, %v571
  %573 = vmatmul.f32.gmra.mxu0 %v546
  %v574 = vpop.f32.mrf.mxu0
  %v575 = vadd.f32 0.0, %v574
  %576 = vmatmul.f32.gmra.mxu0 %v548
  %v577 = vpop.f32.mrf.mxu0
  %v578 = vadd.f32 0.0, %v577
  %579 = vmatmul.f32.gmra.mxu0 %v550
  %v580 = vpop.f32.mrf.mxu0
  %v581 = vadd.f32 0.0, %v580
  %582 = vmatmul.f32.gmra.mxu0 %v552
  %v583 = vpop.f32.mrf.mxu0
  %v584 = vadd.f32 0.0, %v583
  %585 = vdwg.mxu0
  %v586 = vsel %vm71, %v511, 0
  %v589 = vsel %vm71, %v542, 0
  %v591 = vsel %vm71, %v530, 0
  %v593 = vsel %vm71, %v538, 0
  %v595 = vsel %vm71, %v540, 0
  %597 = vmatpush.msra.mxu0 0.0
  %598 = vmatpush.msra.mxu0 0.0
  %599 = vmatpush.msra.mxu0 0.0
  %600 = vmatpush.msra.mxu0 0.0
  %601 = vmatpush.msra.mxu0 0.0
  %602 = vmatpush.msra.mxu0 0.0
  %603 = vmatpush.msra.mxu0 0.0
  %604 = vmatpush.msra.mxu0 0.0
  %605 = vmatpush.msra.mxu0 0.0
  %606 = vmatpush.msra.mxu0 0.0
  %607 = vmatpush.msra.mxu0 0.0
  %608 = vmatpush.msra.mxu0 0.0
  %609 = vmatpush.msra.mxu0 0.0
  %610 = vmatpush.msra.mxu0 0.0
  %611 = vmatpush.msra.mxu0 %v252
  %612 = vmatpush.msra.mxu0 %v249
  %613 = vmatmul.f32.gmra.mxu0 %v586
  %v614 = vpop.f32.mrf.mxu0
  %v615 = vadd.f32 0.0, %v614
  %616 = vmatmul.f32.gmra.mxu0 %v589
  %v617 = vpop.f32.mrf.mxu0
  %v618 = vadd.f32 0.0, %v617
  %619 = vmatmul.f32.gmra.mxu0 %v591
  %v620 = vpop.f32.mrf.mxu0
  %v621 = vadd.f32 0.0, %v620
  %622 = vmatmul.f32.gmra.mxu0 %v593
  %v623 = vpop.f32.mrf.mxu0
  %v624 = vadd.f32 0.0, %v623
  %625 = vmatmul.f32.gmra.mxu0 %v595
  %v626 = vpop.f32.mrf.mxu0
  %v627 = vadd.f32 0.0, %v626
  %628 = vdwg.mxu0
  %629 = vst.msk [vmem:[%s3 + $0x10] sm:$0xff] %vm71, %v572
  %630 = vst.msk [vmem:[%s3 + $0x18] sm:$0xff] %vm71, %v575
  %631 = vst.msk [vmem:[%s3 + $0x20] sm:$0xff] %vm71, %v578
  %632 = vst.msk [vmem:[%s3 + $0x28] sm:$0xff] %vm71, %v581
  %633 = vst.msk [vmem:[%s3 + $0x30] sm:$0xf] %vm341, %v584
  %634 = vst.msk [vmem:[%s3 + $0x48] sm:$0xff] %vm71, %v615
  %635 = vst.msk [vmem:[%s3 + $0x50] sm:$0xff] %vm71, %v618
  %636 = vst.msk [vmem:[%s3 + $0x58] sm:$0xff] %vm71, %v621
  %637 = vst.msk [vmem:[%s3 + $0x60] sm:$0xff] %vm71, %v624
  %638 = vst.msk [vmem:[%s3 + $0x68] sm:$0xf] %vm341, %v627
  // Predicated region
  $region14: #{_wavelet_forward.1} parent=0 // pred_check
    _
  $region15: #{_wavelet_forward.1} parent=0 // pred_check_branch
    %640 = sbr.rel (0) target = $region17
  $region16: #{_wavelet_forward.1} parent=0 // pred_region
    _
  $region17: #{_wavelet_forward.1} parent=0 // pred_fallthru
    _
  // Predicated region
  $region18: #{_wavelet_forward.1} parent=0 // pred_check
    _
  $region19: #{_wavelet_forward.1} parent=0 // pred_check_branch
    %642 = sbr.rel (0) target = $region21
  $region20: #{_wavelet_forward.1} parent=0 // pred_region
    _
  $region21: #{_wavelet_forward.1} parent=0 // pred_fallthru
    _

</llo_original>
